<compile_context>
chip_gen: v5e
topology: v5e:2x2
jax: 0.10.0
libtpu: 0.0.40
codegen_flags: <defaults>
</compile_context>

<pallas_src>
import jax
import jax.numpy as jnp
from jax.experimental import pallas as pl
from jax.experimental.pallas import tpu as pltpu

HIDDEN = 128   # fc1/fc2 width fixed by the module
LANE = 128     # TPU lane width
SUBLANE = 8    # f32 sublane requirement


def _round_up(n, m):
    return ((n + m - 1) // m) * m


def mlp_kernel(x_ref, w1_ref, b1_ref, w2_ref, b2_ref, w3_ref, b3_ref, o_ref):
    # Cast f32 operands to bf16 in-kernel (rides the VPU, which has slack here);
    # avoids separate wrapper-side cast passes over HBM.
    x = x_ref[...].astype(jnp.bfloat16)
    w1 = w1_ref[...].astype(jnp.bfloat16)
    w2 = w2_ref[...].astype(jnp.bfloat16)
    w3 = w3_ref[...].astype(jnp.bfloat16)

    # fc1 + ReLU : bf16 MXU inputs -> f32 accumulation, bias/ReLU in f32
    h1 = jnp.dot(x, w1, preferred_element_type=jnp.float32) + b1_ref[...]
    h1 = jnp.maximum(h1, 0.0).astype(jnp.bfloat16)
    # fc2 + ReLU
    h2 = jnp.dot(h1, w2, preferred_element_type=jnp.float32) + b2_ref[...]
    h2 = jnp.maximum(h2, 0.0).astype(jnp.bfloat16)
    # fc3 (no activation); output block last dim == out_size (full-array dim)
    o_ref[...] = (jnp.dot(h2, w3, preferred_element_type=jnp.float32)
                  + b3_ref[...]).astype(o_ref.dtype)


def model_predictor_forward(x, params, *, tm=512):
    """x: (B, input_size) float32; params: (in,out) weights, (1,out) biases (float32)."""
    B, in_size = x.shape
    out_size = params["w3"].shape[1]

    # Batch tiling: pad only to the sublane requirement, then balance tiles across
    # the grid (avoids a mostly-padding ragged last tile).
    b_pad = _round_up(max(B, SUBLANE), SUBLANE)
    tm_cap = _round_up(tm, SUBLANE)
    nsteps = pl.cdiv(b_pad, tm_cap)
    if nsteps == 1 and b_pad >= 2 * LANE:
        nsteps = 2  # guarantee >=2 grid steps so v7x's second TensorCore gets work
    TM = _round_up(pl.cdiv(b_pad, nsteps), SUBLANE)
    b_pad = nsteps * TM
    grid = (nsteps,)

    if b_pad != B:
        x = jnp.pad(x, ((0, b_pad - B), (0, 0)))

    w1, b1 = params["w1"], params["b1"]
    w2, b2 = params["w2"], params["b2"]
    w3, b3 = params["w3"], params["b3"]

    flops = 2 * b_pad * (in_size * HIDDEN + HIDDEN * HIDDEN + HIDDEN * out_size)
    bytes_accessed = 4 * (b_pad * in_size + b_pad * out_size
                          + w1.size + w2.size + w3.size
                          + b1.size + b2.size + b3.size)

    def resident(shape):
        # Weight/bias tiles: same block every grid step -> DMA'd once, VMEM-resident.
        return pl.BlockSpec(shape, lambda i: (0, 0))

    # VMEM budget: double-buffered x/out tiles + (double-buffered) resident f32
    # weights + headroom; clamp to [16 MiB, 64 MiB] (v7x physical is 64 MiB).
    vmem_bytes = (2 * 4 * TM * (in_size + out_size)
                  + 2 * 4 * (w1.size + w2.size + w3.size
                             + b1.size + b2.size + b3.size)
                  + (4 << 20))
    vmem_limit = int(min(max(vmem_bytes, 16 << 20), 64 << 20))

    out = pl.pallas_call(
        mlp_kernel,
        out_shape=jax.ShapeDtypeStruct((b_pad, out_size), jnp.float32),
        grid=grid,
        in_specs=[
            pl.BlockSpec((TM, in_size), lambda i: (i, 0)),   # x: streamed over batch
            resident((in_size, HIDDEN)),                     # w1
            resident((1, HIDDEN)),                           # b1
            resident((HIDDEN, HIDDEN)),                      # w2
            resident((1, HIDDEN)),                           # b2
            resident((HIDDEN, out_size)),                    # w3
            resident((1, out_size)),                         # b3
        ],
        out_specs=pl.BlockSpec((TM, out_size), lambda i: (i, 0)),
        compiler_params=pltpu.CompilerParams(
            dimension_semantics=("parallel",),
            vmem_limit_bytes=vmem_limit),
        cost_estimate=pl.CostEstimate(
            flops=flops, transcendentals=0, bytes_accessed=bytes_accessed),
    )(x, w1, b1, w2, b2, w3, b3)

    # Strip batch padding (lane axis is already exactly out_size).
    return out[:B] if b_pad != B else out


def init_params(key, input_size, hidden, output_size):
    """Deterministic init mimicking PyTorch's default Linear init U(-1/sqrt(fan_in), 1/sqrt(fan_in))."""
    ks = jax.random.split(key, 6)

    def lin(kw, kb, fan_in, fan_out):
        bound = 1.0 / jnp.sqrt(fan_in)
        w = jax.random.uniform(kw, (fan_in, fan_out), jnp.float32, -bound, bound)
        b = jax.random.uniform(kb, (1, fan_out), jnp.float32, -bound, bound)
        return w, b

    w1, b1 = lin(ks[0], ks[1], input_size, hidden)
    w2, b2 = lin(ks[2], ks[3], hidden, hidden)
    w3, b3 = lin(ks[4], ks[5], hidden, output_size)
    return dict(w1=w1, b1=b1, w2=w2, b2=b2, w3=w3, b3=b3)


def reference_forward_bf16(x, p):
    """Reference mirroring the kernel's numerics: bf16 MXU inputs, f32 accumulation."""
    f = lambda a: a.astype(jnp.bfloat16).astype(jnp.float32)
    hp = "highest"
    h1 = jnp.maximum(jnp.dot(f(x), f(p["w1"]), precision=hp) + p["b1"], 0.0)
    h1 = h1.astype(jnp.bfloat16).astype(jnp.float32)
    h2 = jnp.maximum(jnp.dot(h1, f(p["w2"]), precision=hp) + p["b2"], 0.0)
    h2 = h2.astype(jnp.bfloat16).astype(jnp.float32)
    return jnp.dot(h2, f(p["w3"]), precision=hp) + p["b3"]


def reference_forward_f32(x, p):
    hp = "highest"
    h1 = jnp.maximum(jnp.dot(x, p["w1"], precision=hp) + p["b1"], 0.0)
    h2 = jnp.maximum(jnp.dot(h1, p["w2"], precision=hp) + p["b2"], 0.0)
    return jnp.dot(h2, p["w3"], precision=hp) + p["b3"]


if __name__ == "__main__":
    batch = 8
    input_size = 32
    hidden = 128          # fixed by the module (fc1/fc2 are 128-wide)
    output_size = 16

    key = jax.random.PRNGKey(0)
    kx, kp = jax.random.split(key)
    x = jax.random.normal(kx, (batch, input_size), jnp.float32)
    params = init_params(kp, input_size, hidden, output_size)

    out = model_predictor_forward(x, params)
    out = jax.block_until_ready(out)

    assert out.shape == (batch, output_size)
    # Tight check vs a reference that uses the same bf16-input / f32-accumulate math.
    ref_bf16 = reference_forward_bf16(x, params)
    assert jnp.allclose(out, ref_bf16, atol=1e-3, rtol=1e-3)
    # Loose check vs the pure-f32 reference (bf16 input rounding dominates the error).
    ref_f32 = reference_forward_f32(x, params)
    assert jnp.allclose(out, ref_f32, atol=5e-2, rtol=5e-2)

    print("KERNEL_OK")
</pallas_src>

<mosaic_0001>
module attributes {stable_mosaic.version = 11 : i64} {
  func.func @mlp_kernel(%arg0: i32, %arg1: memref<8x32xf32, #tpu.memory_space<vmem>>, %arg2: memref<32x128xf32, #tpu.memory_space<vmem>>, %arg3: memref<1x128xf32, #tpu.memory_space<vmem>>, %arg4: memref<128x128xf32, #tpu.memory_space<vmem>>, %arg5: memref<1x128xf32, #tpu.memory_space<vmem>>, %arg6: memref<128x16xf32, #tpu.memory_space<vmem>>, %arg7: memref<1x16xf32, #tpu.memory_space<vmem>>, %arg8: memref<8x16xf32, #tpu.memory_space<vmem>>) attributes {dimension_semantics = [#tpu.dimension_semantics<parallel>], iteration_bounds = array<i64: 1>, scalar_prefetch = 0 : i64, scratch_operands = 0 : i64, tpu.core_type = #tpu.core_type<tc>, window_params = [{transform_indices = @transform_0, window_bounds = array<i64: 8, 32>}, {pipeline_mode = #tpu.pipeline_mode<synchronous>, transform_indices = @transform_1, window_bounds = array<i64: 32, 128>}, {pipeline_mode = #tpu.pipeline_mode<synchronous>, transform_indices = @transform_2, window_bounds = array<i64: 1, 128>}, {pipeline_mode = #tpu.pipeline_mode<synchronous>, transform_indices = @transform_3, window_bounds = array<i64: 128, 128>}, {pipeline_mode = #tpu.pipeline_mode<synchronous>, transform_indices = @transform_4, window_bounds = array<i64: 1, 128>}, {pipeline_mode = #tpu.pipeline_mode<synchronous>, transform_indices = @transform_5, window_bounds = array<i64: 128, 16>}, {pipeline_mode = #tpu.pipeline_mode<synchronous>, transform_indices = @transform_6, window_bounds = array<i64: 1, 16>}, {transform_indices = @transform_7, window_bounds = array<i64: 8, 16>}]} {
    %c0 = arith.constant 0 : index
    %c0_0 = arith.constant 0 : index
    %0 = vector.load %arg1[%c0, %c0_0] : memref<8x32xf32, #tpu.memory_space<vmem>>, vector<8x32xf32>
    %1 = arith.truncf %0 : vector<8x32xf32> to vector<8x32xbf16>
    %c0_1 = arith.constant 0 : index
    %c0_2 = arith.constant 0 : index
    %2 = vector.load %arg2[%c0_1, %c0_2] : memref<32x128xf32, #tpu.memory_space<vmem>>, vector<32x128xf32>
    %3 = arith.truncf %2 : vector<32x128xf32> to vector<32x128xbf16>
    %c0_3 = arith.constant 0 : index
    %c0_4 = arith.constant 0 : index
    %4 = vector.load %arg4[%c0_3, %c0_4] : memref<128x128xf32, #tpu.memory_space<vmem>>, vector<128x128xf32>
    %5 = arith.truncf %4 : vector<128x128xf32> to vector<128x128xbf16>
    %c0_5 = arith.constant 0 : index
    %c0_6 = arith.constant 0 : index
    %6 = vector.load %arg6[%c0_5, %c0_6] : memref<128x16xf32, #tpu.memory_space<vmem>>, vector<128x16xf32>
    %7 = arith.truncf %6 : vector<128x16xf32> to vector<128x16xbf16>
    %cst = arith.constant dense<0.000000e+00> : vector<8x128xf32>
    %8 = tpu.matmul %1, %3, %cst {dimension_numbers = #tpu.dot_dimension_numbers<[1], [0], [0], [1], [0, 0, 1, 1], [], []>} : vector<8x32xbf16>, vector<32x128xbf16>, vector<8x128xf32> -> vector<8x128xf32>
    %c0_7 = arith.constant 0 : index
    %c0_8 = arith.constant 0 : index
    %9 = vector.load %arg3[%c0_7, %c0_8] : memref<1x128xf32, #tpu.memory_space<vmem>>, vector<1x128xf32>
    %10 = vector.broadcast %9 : vector<1x128xf32> to vector<8x128xf32>
    %11 = arith.addf %8, %10 : vector<8x128xf32>
    %cst_9 = arith.constant 0.000000e+00 : f32
    %12 = vector.broadcast %cst_9 : f32 to vector<8x128xf32>
    %13 = arith.maximumf %11, %12 : vector<8x128xf32>
    %14 = arith.truncf %13 : vector<8x128xf32> to vector<8x128xbf16>
    %cst_10 = arith.constant dense<0.000000e+00> : vector<8x128xf32>
    %15 = tpu.matmul %14, %5, %cst_10 {dimension_numbers = #tpu.dot_dimension_numbers<[1], [0], [0], [1], [0, 0, 1, 1], [], []>} : vector<8x128xbf16>, vector<128x128xbf16>, vector<8x128xf32> -> vector<8x128xf32>
    %c0_11 = arith.constant 0 : index
    %c0_12 = arith.constant 0 : index
    %16 = vector.load %arg5[%c0_11, %c0_12] : memref<1x128xf32, #tpu.memory_space<vmem>>, vector<1x128xf32>
    %17 = vector.broadcast %16 : vector<1x128xf32> to vector<8x128xf32>
    %18 = arith.addf %15, %17 : vector<8x128xf32>
    %cst_13 = arith.constant 0.000000e+00 : f32
    %19 = vector.broadcast %cst_13 : f32 to vector<8x128xf32>
    %20 = arith.maximumf %18, %19 : vector<8x128xf32>
    %21 = arith.truncf %20 : vector<8x128xf32> to vector<8x128xbf16>
    %cst_14 = arith.constant dense<0.000000e+00> : vector<8x16xf32>
    %22 = tpu.matmul %21, %7, %cst_14 {dimension_numbers = #tpu.dot_dimension_numbers<[1], [0], [0], [1], [0, 0, 1, 1], [], []>} : vector<8x128xbf16>, vector<128x16xbf16>, vector<8x16xf32> -> vector<8x16xf32>
    %c0_15 = arith.constant 0 : index
    %c0_16 = arith.constant 0 : index
    %23 = vector.load %arg7[%c0_15, %c0_16] : memref<1x16xf32, #tpu.memory_space<vmem>>, vector<1x16xf32>
    %24 = vector.broadcast %23 : vector<1x16xf32> to vector<8x16xf32>
    %25 = arith.addf %22, %24 : vector<8x16xf32>
    %c0_17 = arith.constant 0 : index
    %c0_18 = arith.constant 0 : index
    %26 = vector.load %arg8[%c0_17, %c0_18] : memref<8x16xf32, #tpu.memory_space<vmem>>, vector<8x16xf32>
    tpu.vector_store %arg8[%c0_17, %c0_18], %25 {strides = array<i32>} : memref<8x16xf32, #tpu.memory_space<vmem>>, vector<8x16xf32>,
    return
  }
  func.func @transform_0(%arg0: i32) -> (i32, i32) {
    %c0_i32 = arith.constant 0 : i32
    %c0_i32_0 = arith.constant 0 : i32
    return %arg0, %c0_i32 : i32, i32
  }
  func.func @transform_1(%arg0: i32) -> (i32, i32) {
    %c0_i32 = arith.constant 0 : i32
    %c0_i32_0 = arith.constant 0 : i32
    %c0_i32_1 = arith.constant 0 : i32
    return %c0_i32, %c0_i32_0 : i32, i32
  }
  func.func @transform_2(%arg0: i32) -> (i32, i32) {
    %c0_i32 = arith.constant 0 : i32
    %c0_i32_0 = arith.constant 0 : i32
    %c0_i32_1 = arith.constant 0 : i32
    return %c0_i32, %c0_i32_0 : i32, i32
  }
  func.func @transform_3(%arg0: i32) -> (i32, i32) {
    %c0_i32 = arith.constant 0 : i32
    %c0_i32_0 = arith.constant 0 : i32
    %c0_i32_1 = arith.constant 0 : i32
    return %c0_i32, %c0_i32_0 : i32, i32
  }
  func.func @transform_4(%arg0: i32) -> (i32, i32) {
    %c0_i32 = arith.constant 0 : i32
    %c0_i32_0 = arith.constant 0 : i32
    %c0_i32_1 = arith.constant 0 : i32
    return %c0_i32, %c0_i32_0 : i32, i32
  }
  func.func @transform_5(%arg0: i32) -> (i32, i32) {
    %c0_i32 = arith.constant 0 : i32
    %c0_i32_0 = arith.constant 0 : i32
    %c0_i32_1 = arith.constant 0 : i32
    return %c0_i32, %c0_i32_0 : i32, i32
  }
  func.func @transform_6(%arg0: i32) -> (i32, i32) {
    %c0_i32 = arith.constant 0 : i32
    %c0_i32_0 = arith.constant 0 : i32
    %c0_i32_1 = arith.constant 0 : i32
    return %c0_i32, %c0_i32_0 : i32, i32
  }
  func.func @transform_7(%arg0: i32) -> (i32, i32) {
    %c0_i32 = arith.constant 0 : i32
    %c0_i32_0 = arith.constant 0 : i32
    return %arg0, %c0_i32 : i32, i32
  }
}

</mosaic_0001>

<llo_original>
// kernel: tpu_custom_call.1
$region0: #{tpu_custom_call.1}
  #allocation0 [shape = 'u32[]', space=smem, size = 0x4, offset = 0x4, fixed_abs, tag = 'smem constant byte address 0x4 - core index']
  #allocation1 [shape = 'u32[72,128]{1,0:T(1,128)}', space=vmem, size = 0x9000, scoped, tag = 'internal scratch']
  %s0 = inlined_call_operand.vmem [shape: f32[8,32], index: 0, kind: input, shape index: {}]
  %s1 = inlined_call_operand.hbm [shape: f32[32,128], index: 1, kind: input, shape index: {}]
  %s2 = inlined_call_operand.vmem [shape: f32[1,128], index: 2, kind: input, shape index: {}]
  %s3 = inlined_call_operand.vmem [shape: f32[128,128], index: 3, kind: input, shape index: {}]
  %s4 = inlined_call_operand.vmem [shape: f32[1,128], index: 4, kind: input, shape index: {}]
  %s5 = inlined_call_operand.vmem [shape: f32[128,16], index: 5, kind: input, shape index: {}]
  %s6 = inlined_call_operand.vmem [shape: f32[1,16], index: 6, kind: input, shape index: {}]
  %s7 = inlined_call_operand.hbm [shape: f32[8,16], index: 7, kind: output, shape index: {}]
  %s8 = sld [smem:[#allocation0]]
  $region42: #{tpu_custom_call.1} parent=0
    _
  %s10 = ssub.s32 1, %s8
  %s11 = scalar_select 0, %s10, %s8
  $region1: #{tpu_custom_call.1} parent=0
    #allocation2 [shape = 'u8[16384]{0}', space=vmem, size = 0x4000, scoped, tag = 'input window, operand 1, single buffered']
    #allocation3 [shape = 's32[1]{0}', space=sflag, size = 0x4, scoped, tag = 'scoped memory for tpu_custom_call.1']
    #allocation4 [shape = 's32[1]{0}', space=sflag, size = 0x4, scoped, tag = 'scoped memory for tpu_custom_call.1']
    #allocation5 [shape = 'u8[4096]{0}', space=vmem, size = 0x1000, scoped, tag = 'output window, operand 0, single buffered']
    %12 = vsyncpa [#allocation3], 0
    %13 = vsyncpa [#allocation4], 0
    // Predicated region
    $region2: #{tpu_custom_call.1} parent=1 // pred_check
      _
    $region3: #{tpu_custom_call.1} parent=1 // pred_check_branch
      %15 = sbr.rel (0) target = $region5
    $region4: #{tpu_custom_call.1} parent=1 // pred_region
      _
    $region5: #{tpu_custom_call.1} parent=1 // pred_fallthru
      _
    // Predicated region
    $region6: #{tpu_custom_call.1} parent=1 // pred_check
      _
    $region7: #{tpu_custom_call.1} parent=1 // pred_check_branch
      %17 = sbr.rel (0) target = $region9
    $region8: #{tpu_custom_call.1} parent=1 // pred_region
      %19 = vsyncadd [#allocation3], 0
      %s20 = sshll.u32 %s1, 4
      %s21 = int_to_ptr.hbm [resolvable:$true] %s20
      %s22 = sshll.u32 [#allocation2], 4
      %s23 = int_to_ptr.vmem [resolvable:$true] %s22
      %28 = dma.hbm_to_vmem [thread:$0]  %s21, 512, %s23, [#allocation3], 128, 128, 8
    $region9: #{tpu_custom_call.1} parent=1 // pred_fallthru
      _
    // Predicated region
    $region10: #{tpu_custom_call.1} parent=1 // pred_check
      _
    $region11: #{tpu_custom_call.1} parent=1 // pred_check_branch
      %30 = sbr.rel (0) target = $region13
    $region12: #{tpu_custom_call.1} parent=1 // pred_region
      _
    $region13: #{tpu_custom_call.1} parent=1 // pred_fallthru
      _
    // Predicated region
    $region14: #{tpu_custom_call.1} parent=1 // pred_check
      _
    $region15: #{tpu_custom_call.1} parent=1 // pred_check_branch
      %32 = sbr.rel (0) target = $region17
    $region16: #{tpu_custom_call.1} parent=1 // pred_region
      _
    $region17: #{tpu_custom_call.1} parent=1 // pred_fallthru
      _
    // Predicated region
    $region18: #{tpu_custom_call.1} parent=1 // pred_check
      _
    $region19: #{tpu_custom_call.1} parent=1 // pred_check_branch
      %34 = sbr.rel (0) target = $region21
    $region20: #{tpu_custom_call.1} parent=1 // pred_region
      _
    $region21: #{tpu_custom_call.1} parent=1 // pred_fallthru
      _
    // Predicated region
    $region22: #{tpu_custom_call.1} parent=1 // pred_check
      _
    $region23: #{tpu_custom_call.1} parent=1 // pred_check_branch
      %36 = sbr.rel (0) target = $region25
    $region24: #{tpu_custom_call.1} parent=1 // pred_region
      _
    $region25: #{tpu_custom_call.1} parent=1 // pred_fallthru
      _
    // Predicated region
    $region26: #{tpu_custom_call.1} parent=1 // pred_check
      _
    $region27: #{tpu_custom_call.1} parent=1 // pred_check_branch
      %38 = sbr.rel (0) target = $region29
    $region28: #{tpu_custom_call.1} parent=1 // pred_region
      _
    $region29: #{tpu_custom_call.1} parent=1 // pred_fallthru
      _
    // Predicated region
    $region30: #{tpu_custom_call.1} parent=1 // pred_check
      _
    $region31: #{tpu_custom_call.1} parent=1 // pred_check_branch
      %40 = sbr.rel (0) target = $region33
    $region32: #{tpu_custom_call.1} parent=1 // pred_region
      %42 = dma.done [#allocation3], 512
    $region33: #{tpu_custom_call.1} parent=1 // pred_fallthru
      _
    %v44 = vld [vmem:[%s0] sm:$0xff]
    %v45 = vpack.c.bf16 %v44, %v44
    %v46 = vld [vmem:[#allocation2] sm:$0xff]
    %v47 = vld [vmem:[#allocation2 + $0x8] sm:$0xff]
    %v48 = vld [vmem:[#allocation2 + $0x10] sm:$0xff]
    %v49 = vld [vmem:[#allocation2 + $0x18] sm:$0xff]
    %v50 = vpack.c.bf16 %v47, %v46
    %v51 = vpack.c.bf16 %v49, %v48
    %v52 = vld [vmem:[%s3] sm:$0xff]
    %v53 = vld [vmem:[%s3 + $0x8] sm:$0xff]
    %v54 = vld [vmem:[%s3 + $0x10] sm:$0xff]
    %v55 = vld [vmem:[%s3 + $0x18] sm:$0xff]
    %v56 = vld [vmem:[%s3 + $0x20] sm:$0xff]
    %v57 = vld [vmem:[%s3 + $0x28] sm:$0xff]
    %v58 = vld [vmem:[%s3 + $0x30] sm:$0xff]
    %v59 = vld [vmem:[%s3 + $0x38] sm:$0xff]
    %v60 = vld [vmem:[%s3 + $0x40] sm:$0xff]
    %v61 = vld [vmem:[%s3 + $0x48] sm:$0xff]
    %v62 = vld [vmem:[%s3 + $0x50] sm:$0xff]
    %v63 = vld [vmem:[%s3 + $0x58] sm:$0xff]
    %v64 = vld [vmem:[%s3 + $0x60] sm:$0xff]
    %v65 = vld [vmem:[%s3 + $0x68] sm:$0xff]
    %v66 = vld [vmem:[%s3 + $0x70] sm:$0xff]
    %v67 = vld [vmem:[%s3 + $0x78] sm:$0xff]
    %v68 = vpack.c.bf16 %v53, %v52
    %v69 = vpack.c.bf16 %v55, %v54
    %v70 = vpack.c.bf16 %v57, %v56
    %v71 = vpack.c.bf16 %v59, %v58
    %v72 = vpack.c.bf16 %v61, %v60
    %v73 = vpack.c.bf16 %v63, %v62
    %v74 = vpack.c.bf16 %v65, %v64
    %v75 = vpack.c.bf16 %v67, %v66
    %v76 = vld [vmem:[%s5] sm:$0xff]
    %v77 = vld [vmem:[%s5 + $0x8] sm:$0xff]
    %v78 = vld [vmem:[%s5 + $0x10] sm:$0xff]
    %v79 = vld [vmem:[%s5 + $0x18] sm:$0xff]
    %v80 = vld [vmem:[%s5 + $0x20] sm:$0xff]
    %v81 = vld [vmem:[%s5 + $0x28] sm:$0xff]
    %v82 = vld [vmem:[%s5 + $0x30] sm:$0xff]
    %v83 = vld [vmem:[%s5 + $0x38] sm:$0xff]
    %v84 = vld [vmem:[%s5 + $0x40] sm:$0xff]
    %v85 = vld [vmem:[%s5 + $0x48] sm:$0xff]
    %v86 = vld [vmem:[%s5 + $0x50] sm:$0xff]
    %v87 = vld [vmem:[%s5 + $0x58] sm:$0xff]
    %v88 = vld [vmem:[%s5 + $0x60] sm:$0xff]
    %v89 = vld [vmem:[%s5 + $0x68] sm:$0xff]
    %v90 = vld [vmem:[%s5 + $0x70] sm:$0xff]
    %v91 = vld [vmem:[%s5 + $0x78] sm:$0xff]
    %v92 = vpack.c.bf16 %v77, %v76
    %v93 = vpack.c.bf16 %v79, %v78
    %v94 = vpack.c.bf16 %v81, %v80
    %v95 = vpack.c.bf16 %v83, %v82
    %v96 = vpack.c.bf16 %v85, %v84
    %v97 = vpack.c.bf16 %v87, %v86
    %v98 = vpack.c.bf16 %v89, %v88
    %v99 = vpack.c.bf16 %v91, %v90
    %v100 = vld [vmem:[%s2] sm:$0x1]
    %v102 = vperm.slane %v100, 0
    %vm104 = vcmask 261120
    %v106 = vsel %vm104, %v45, 0
    %108 = vmatpush.bf16.msra.mxu0 0
    %109 = vmatpush.bf16.msra.mxu0 0
    %110 = vmatpush.bf16.msra.mxu0 0
    %111 = vmatpush.bf16.msra.mxu0 0
    %112 = vmatpush.bf16.msra.mxu0 0
    %113 = vmatpush.bf16.msra.mxu0 0
    %114 = vmatpush.bf16.msra.mxu0 %v51
    %115 = vmatpush.bf16.msra.mxu0 %v50
    %116 = vmatmul.bf16.gmra.mxu0 %v106
    %v117 = vpop.f32.mrf.mxu0
    %v118 = vadd.f32 %v102, %v117
    %v119 = vpop.f32.mrf.mxu0
    %120 = vdwg.mxu0
    %v121 = vmax.f32 %v118, 0.0
    %v122 = vpack.c.bf16 %v121, %v121
    %v123 = vld [vmem:[%s4] sm:$0x1]
    %v125 = vperm.slane %v123, 0
    %127 = vmatpush.bf16.msra.mxu0 %v75
    %128 = vmatpush.bf16.msra.mxu0 %v74
    %129 = vmatpush.bf16.msra.mxu0 %v73
    %130 = vmatpush.bf16.msra.mxu0 %v72
    %131 = vmatpush.bf16.msra.mxu0 %v71
    %132 = vmatpush.bf16.msra.mxu0 %v70
    %133 = vmatpush.bf16.msra.mxu0 %v69
    %134 = vmatpush.bf16.msra.mxu0 %v68
    %135 = vmatmul.bf16.gmra.mxu0 %v122
    %v136 = vpop.f32.mrf.mxu0
    %v137 = vadd.f32 %v125, %v136
    %v138 = vpop.f32.mrf.mxu0
    %139 = vdwg.mxu0
    %v140 = vmax.f32 %v137, 0.0
    %v141 = vpack.c.bf16 %v140, %v140
    %v142 = vld [vmem:[%s6] sm:$0x1]
    %v144 = vperm.slane %v142, 0
    %146 = vmatpush.bf16.msra.mxu0 %v99
    %147 = vmatpush.bf16.msra.mxu0 %v98
    %148 = vmatpush.bf16.msra.mxu0 %v97
    %149 = vmatpush.bf16.msra.mxu0 %v96
    %150 = vmatpush.bf16.msra.mxu0 %v95
    %151 = vmatpush.bf16.msra.mxu0 %v94
    %152 = vmatpush.bf16.msra.mxu0 %v93
    %153 = vmatpush.bf16.msra.mxu0 %v92
    %154 = vmatmul.bf16.gmra.mxu0 %v141
    %v155 = vpop.f32.mrf.mxu0
    %v156 = vadd.f32 %v144, %v155
    %v157 = vpop.f32.mrf.mxu0
    %158 = vdwg.mxu0
    %vm159 = vcmask 130048
    %160 = vst.msk [vmem:[#allocation5] sm:$0xff] %vm159, %v156
    // Predicated region
    $region34: #{tpu_custom_call.1} parent=1 // pred_check
      _
    $region35: #{tpu_custom_call.1} parent=1 // pred_check_branch
      %162 = sbr.rel (0) target = $region37
    $region36: #{tpu_custom_call.1} parent=1 // pred_region
      %164 = vsyncadd [#allocation4], 0
      %s166 = sshll.u32 [#allocation5], 4
      %s167 = int_to_ptr.vmem [resolvable:$true] %s166
      %s168 = sshll.u32 %s7, 4
      %s169 = int_to_ptr.hbm [resolvable:$true] %s168
      %171 = dma.vmem_to_hbm [thread:$0]  %s167, 128, %s169, [#allocation4]
    $region37: #{tpu_custom_call.1} parent=1 // pred_fallthru
      _
    // Predicated region
    $region38: #{tpu_custom_call.1} parent=1 // pred_check
      _
    $region39: #{tpu_custom_call.1} parent=1 // pred_check_branch
      %173 = sbr.rel (0) target = $region41
    $region40: #{tpu_custom_call.1} parent=1 // pred_region
      %175 = dma.done [#allocation4], 128
    $region41: #{tpu_custom_call.1} parent=1 // pred_fallthru
      _
    %176 = vsyncpa [#allocation3], 1
    %177 = vsyncpa [#allocation4], 1

</llo_original>
